<compile_context>
chip_gen: v5e
topology: v5e:2x2
jax: 0.10.0
libtpu: 0.0.40
codegen_flags: <defaults>
</compile_context>

<pallas_src>
import functools

import jax
import jax.numpy as jnp
from jax.experimental import pallas as pl
from jax.experimental.pallas import tpu as pltpu

NEG_SLOPE = 0.01  # torch leaky_relu default

# ~2 KiB/row of double-buffered, lane-padded x+out VMEM -> 4096 rows ~= 8 MiB,
# safely inside v5e's 16 MiB scoped-VMEM default (and v7x's 64 MiB physical).
_MAX_TM = 4096


def _round_up(n, m):
    return ((n + m - 1) // m) * m


def _default_num_batch_shards():
    """2 on v7x (2 TensorCores/chip) so the parallel batch axis uses both TCs;
    1 on v5e/v6e (single TC) so we pay zero extra per-grid-step overhead."""
    try:
        kind = jax.devices()[0].device_kind.lower()
    except Exception:
        return 1
    return 2 if "v7" in kind else 1


def _mlp_softmax_kernel(num_layers, *refs):
    # refs = (x_ref, w0, b0, w1, b1, ..., o_ref)
    x_ref = refs[0]
    o_ref = refs[-1]
    params = refs[1:-1]

    h = x_ref[...].astype(jnp.float32)
    for i in range(num_layers):
        w = params[2 * i][...].astype(jnp.float32)
        b = params[2 * i + 1][...].astype(jnp.float32)
        # MXU matmul with f32 accumulation; single bias broadcast-add per layer.
        h = jnp.dot(h, w, preferred_element_type=jnp.float32) + b
        if i < num_layers - 1:
            # leaky_relu between layers (not after the last one).
            h = jnp.maximum(h, NEG_SLOPE * h)

    # Numerically-stable softmax over the last (feature) dim. Exact divide:
    # one op per 16-wide row, negligible, and rows sum to 1 in full f32.
    m = jnp.max(h, axis=-1, keepdims=True)
    e = jnp.exp(h - m)
    s = jnp.sum(e, axis=-1, keepdims=True)
    o_ref[...] = (e / s).astype(o_ref.dtype)


def nn_softmax_forward(x, weights, biases, *, block_b=None, out_dtype=jnp.float32,
                       num_batch_shards=None):
    """x: (B, inSize); weights[i]: (in_i, out_i); biases[i]: (1, out_i).

    block_b: optional cap on the batch tile (rows per grid step). Default None
      -> auto: one tile per TensorCore shard (1 on v5e/v6e, 2 on v7x), capped
      at 4096 rows to stay inside v5e's 16 MiB scoped-VMEM default.
    out_dtype: dtype of the softmax output (bf16 halves output HBM bytes).
    x may be bf16 to halve input HBM bytes; compute is always f32.
    """
    num_layers = len(weights)
    B, in_size = x.shape
    out_size = weights[-1].shape[1]

    if num_batch_shards is None:
        num_batch_shards = _default_num_batch_shards()

    # --- tile / grid selection (minimize grid steps; tm always multiple of 8)
    b_pad = _round_up(B, 8)
    tm = _round_up(pl.cdiv(b_pad, max(num_batch_shards, 1)), 8)
    tm = min(tm, _MAX_TM)
    if block_b is not None:
        tm = min(tm, _round_up(min(block_b, b_pad), 8))
    tm = max(tm, 8)
    b_pad = _round_up(B, tm)
    if b_pad != B:
        x = jnp.pad(x, ((0, b_pad - B), (0, 0)))
    grid = (b_pad // tm,)

    # x / out are tiled along the batch; weights & biases are grid-invariant
    # (constant index_map) so they stay resident in VMEM across iterations.
    in_specs = [pl.BlockSpec((tm, in_size), lambda i: (i, 0))]
    operands = [x]
    for w, b in zip(weights, biases):
        in_specs.append(pl.BlockSpec(w.shape, lambda i: (0, 0)))
        in_specs.append(pl.BlockSpec(b.shape, lambda i: (0, 0)))
        operands += [w, b]
    out_spec = pl.BlockSpec((tm, out_size), lambda i: (i, 0))

    out_itemsize = jnp.dtype(out_dtype).itemsize
    flops = 2 * b_pad * sum(w.shape[0] * w.shape[1] for w in weights)
    bytes_accessed = (
        x.size * x.dtype.itemsize
        + sum(w.size * w.dtype.itemsize for w in weights)
        + sum(b.size * b.dtype.itemsize for b in biases)
        + b_pad * out_size * out_itemsize
    )
    cost = pl.CostEstimate(
        flops=flops,
        transcendentals=b_pad * out_size,  # exp in the softmax
        bytes_accessed=bytes_accessed,
    )

    kernel = functools.partial(_mlp_softmax_kernel, num_layers)
    out = pl.pallas_call(
        kernel,
        out_shape=jax.ShapeDtypeStruct((b_pad, out_size), out_dtype),
        grid=grid,
        in_specs=in_specs,
        out_specs=out_spec,
        compiler_params=pltpu.CompilerParams(
            dimension_semantics=("parallel",),
        ),
        cost_estimate=cost,
    )(*operands)

    return out[:B] if b_pad != B else out


def init_params(key, in_size, out_size, hidden_layers):
    """Deterministic init mirroring nn.Linear shapes (stored as (in, out))."""
    sizes = [in_size] + list(hidden_layers) + [out_size]
    weights, biases = [], []
    for i in range(len(sizes) - 1):
        fan_in, fan_out = sizes[i], sizes[i + 1]
        key, kw, kb = jax.random.split(key, 3)
        bound = 1.0 / jnp.sqrt(fan_in)
        w = jax.random.uniform(kw, (fan_in, fan_out), jnp.float32, -bound, bound)
        b = jax.random.uniform(kb, (1, fan_out), jnp.float32, -bound, bound)
        weights.append(w)
        biases.append(b)
    return weights, biases


def reference_forward(x, weights, biases):
    h = x.astype(jnp.float32)
    for i, (w, b) in enumerate(zip(weights, biases)):
        h = h @ w + b
        if i < len(weights) - 1:
            h = jnp.where(h > 0, h, NEG_SLOPE * h)
    return jax.nn.softmax(h, axis=-1)


if __name__ == "__main__":
    # Shapes consistent with the module: NN_softmax(inSize=32, outSize=16,
    # layers=[64, 32]) applied to a batch of 8 observation vectors.
    B, IN_SIZE, OUT_SIZE = 8, 32, 16
    HIDDEN = [64, 32]

    key = jax.random.PRNGKey(0)
    key, kx = jax.random.split(key)
    x = jax.random.normal(kx, (B, IN_SIZE), jnp.float32)
    weights, biases = init_params(key, IN_SIZE, OUT_SIZE, HIDDEN)

    out = jax.block_until_ready(nn_softmax_forward(x, weights, biases))
    ref = reference_forward(x, weights, biases)
    assert out.shape == (B, OUT_SIZE)
    assert jnp.allclose(out, ref, atol=1e-5, rtol=1e-5), "mismatch vs reference"
    assert jnp.allclose(jnp.sum(out, axis=-1), 1.0, atol=1e-5), "rows must sum to 1"

    # Exercise the multi-step grid + batch-padding path at a larger batch
    # (block_b=256 forces 4 grid steps and B=1000 -> padded to 1024).
    key, kx2 = jax.random.split(key)
    B2 = 1000
    x2 = jax.random.normal(kx2, (B2, IN_SIZE), jnp.float32)
    out2 = jax.block_until_ready(
        nn_softmax_forward(x2, weights, biases, block_b=256))
    ref2 = reference_forward(x2, weights, biases)
    assert out2.shape == (B2, OUT_SIZE)
    assert jnp.allclose(out2, ref2, atol=1e-5, rtol=1e-5), "large-batch mismatch"

    # Default auto-tiling path at the same batch (single tile on v5e/v6e,
    # 2 even tiles on v7x), plus the HBM-narrowing bf16-in / bf16-out option.
    out3 = jax.block_until_ready(
        nn_softmax_forward(x2.astype(jnp.bfloat16), weights, biases,
                           out_dtype=jnp.bfloat16))
    assert out3.shape == (B2, OUT_SIZE)
    assert jnp.allclose(out3.astype(jnp.float32), ref2, atol=2e-2, rtol=2e-2), \
        "bf16-IO mismatch"

    print("KERNEL_OK")
</pallas_src>

<mosaic_0001>
module attributes {stable_mosaic.version = 11 : i64} {
  func.func @_mlp_softmax_kernel(%arg0: i32, %arg1: memref<8x32xf32, #tpu.memory_space<vmem>>, %arg2: memref<32x64xf32, #tpu.memory_space<vmem>>, %arg3: memref<1x64xf32, #tpu.memory_space<vmem>>, %arg4: memref<64x32xf32, #tpu.memory_space<vmem>>, %arg5: memref<1x32xf32, #tpu.memory_space<vmem>>, %arg6: memref<32x16xf32, #tpu.memory_space<vmem>>, %arg7: memref<1x16xf32, #tpu.memory_space<vmem>>, %arg8: memref<8x16xf32, #tpu.memory_space<vmem>>) attributes {dimension_semantics = [#tpu.dimension_semantics<parallel>], iteration_bounds = array<i64: 1>, scalar_prefetch = 0 : i64, scratch_operands = 0 : i64, tpu.core_type = #tpu.core_type<tc>, window_params = [{transform_indices = @transform_0, window_bounds = array<i64: 8, 32>}, {pipeline_mode = #tpu.pipeline_mode<synchronous>, transform_indices = @transform_1, window_bounds = array<i64: 32, 64>}, {pipeline_mode = #tpu.pipeline_mode<synchronous>, transform_indices = @transform_2, window_bounds = array<i64: 1, 64>}, {pipeline_mode = #tpu.pipeline_mode<synchronous>, transform_indices = @transform_3, window_bounds = array<i64: 64, 32>}, {pipeline_mode = #tpu.pipeline_mode<synchronous>, transform_indices = @transform_4, window_bounds = array<i64: 1, 32>}, {pipeline_mode = #tpu.pipeline_mode<synchronous>, transform_indices = @transform_5, window_bounds = array<i64: 32, 16>}, {pipeline_mode = #tpu.pipeline_mode<synchronous>, transform_indices = @transform_6, window_bounds = array<i64: 1, 16>}, {transform_indices = @transform_7, window_bounds = array<i64: 8, 16>}]} {
    %c0 = arith.constant 0 : index
    %c0_0 = arith.constant 0 : index
    %0 = vector.load %arg1[%c0, %c0_0] : memref<8x32xf32, #tpu.memory_space<vmem>>, vector<8x32xf32>
    %c0_1 = arith.constant 0 : index
    %c0_2 = arith.constant 0 : index
    %1 = vector.load %arg2[%c0_1, %c0_2] : memref<32x64xf32, #tpu.memory_space<vmem>>, vector<32x64xf32>
    %c0_3 = arith.constant 0 : index
    %c0_4 = arith.constant 0 : index
    %2 = vector.load %arg3[%c0_3, %c0_4] : memref<1x64xf32, #tpu.memory_space<vmem>>, vector<1x64xf32>
    %cst = arith.constant dense<0.000000e+00> : vector<8x64xf32>
    %3 = tpu.matmul %0, %1, %cst {dimension_numbers = #tpu.dot_dimension_numbers<[1], [0], [0], [1], [0, 0, 1, 1], [], []>} : vector<8x32xf32>, vector<32x64xf32>, vector<8x64xf32> -> vector<8x64xf32>
    %4 = vector.broadcast %2 : vector<1x64xf32> to vector<8x64xf32>
    %5 = arith.addf %3, %4 : vector<8x64xf32>
    %cst_5 = arith.constant 0.00999999977 : f32
    %6 = vector.broadcast %cst_5 : f32 to vector<8x64xf32>
    %7 = arith.mulf %6, %5 : vector<8x64xf32>
    %8 = arith.maximumf %5, %7 : vector<8x64xf32>
    %c0_6 = arith.constant 0 : index
    %c0_7 = arith.constant 0 : index
    %9 = vector.load %arg4[%c0_6, %c0_7] : memref<64x32xf32, #tpu.memory_space<vmem>>, vector<64x32xf32>
    %c0_8 = arith.constant 0 : index
    %c0_9 = arith.constant 0 : index
    %10 = vector.load %arg5[%c0_8, %c0_9] : memref<1x32xf32, #tpu.memory_space<vmem>>, vector<1x32xf32>
    %cst_10 = arith.constant dense<0.000000e+00> : vector<8x32xf32>
    %11 = tpu.matmul %8, %9, %cst_10 {dimension_numbers = #tpu.dot_dimension_numbers<[1], [0], [0], [1], [0, 0, 1, 1], [], []>} : vector<8x64xf32>, vector<64x32xf32>, vector<8x32xf32> -> vector<8x32xf32>
    %12 = vector.broadcast %10 : vector<1x32xf32> to vector<8x32xf32>
    %13 = arith.addf %11, %12 : vector<8x32xf32>
    %cst_11 = arith.constant 0.00999999977 : f32
    %14 = vector.broadcast %cst_11 : f32 to vector<8x32xf32>
    %15 = arith.mulf %14, %13 : vector<8x32xf32>
    %16 = arith.maximumf %13, %15 : vector<8x32xf32>
    %c0_12 = arith.constant 0 : index
    %c0_13 = arith.constant 0 : index
    %17 = vector.load %arg6[%c0_12, %c0_13] : memref<32x16xf32, #tpu.memory_space<vmem>>, vector<32x16xf32>
    %c0_14 = arith.constant 0 : index
    %c0_15 = arith.constant 0 : index
    %18 = vector.load %arg7[%c0_14, %c0_15] : memref<1x16xf32, #tpu.memory_space<vmem>>, vector<1x16xf32>
    %cst_16 = arith.constant dense<0.000000e+00> : vector<8x16xf32>
    %19 = tpu.matmul %16, %17, %cst_16 {dimension_numbers = #tpu.dot_dimension_numbers<[1], [0], [0], [1], [0, 0, 1, 1], [], []>} : vector<8x32xf32>, vector<32x16xf32>, vector<8x16xf32> -> vector<8x16xf32>
    %20 = vector.broadcast %18 : vector<1x16xf32> to vector<8x16xf32>
    %21 = arith.addf %19, %20 : vector<8x16xf32>
    %cst_17 = arith.constant dense<0xFF800000> : vector<8xf32>
    %22 = vector.multi_reduction <maximumf>, %21, %cst_17 [1] : vector<8x16xf32> to vector<8xf32>
    %23 = vector.shape_cast %22 : vector<8xf32> to vector<8x1xf32>
    %24 = vector.broadcast %23 : vector<8x1xf32> to vector<8x16xf32>
    %25 = arith.subf %21, %24 : vector<8x16xf32>
    %26 = math.exp %25 : vector<8x16xf32>
    %cst_18 = arith.constant dense<0.000000e+00> : vector<8xf32>
    %27 = vector.multi_reduction <add>, %26, %cst_18 [1] : vector<8x16xf32> to vector<8xf32>
    %28 = vector.shape_cast %27 : vector<8xf32> to vector<8x1xf32>
    %29 = vector.broadcast %28 : vector<8x1xf32> to vector<8x16xf32>
    %30 = arith.divf %26, %29 : vector<8x16xf32>
    %c0_19 = arith.constant 0 : index
    %c0_20 = arith.constant 0 : index
    %31 = vector.load %arg8[%c0_19, %c0_20] : memref<8x16xf32, #tpu.memory_space<vmem>>, vector<8x16xf32>
    tpu.vector_store %arg8[%c0_19, %c0_20], %30 {strides = array<i32>} : memref<8x16xf32, #tpu.memory_space<vmem>>, vector<8x16xf32>,
    return
  }
  func.func @transform_0(%arg0: i32) -> (i32, i32) {
    %c0_i32 = arith.constant 0 : i32
    %c0_i32_0 = arith.constant 0 : i32
    return %arg0, %c0_i32 : i32, i32
  }
  func.func @transform_1(%arg0: i32) -> (i32, i32) {
    %c0_i32 = arith.constant 0 : i32
    %c0_i32_0 = arith.constant 0 : i32
    %c0_i32_1 = arith.constant 0 : i32
    return %c0_i32, %c0_i32_0 : i32, i32
  }
  func.func @transform_2(%arg0: i32) -> (i32, i32) {
    %c0_i32 = arith.constant 0 : i32
    %c0_i32_0 = arith.constant 0 : i32
    %c0_i32_1 = arith.constant 0 : i32
    return %c0_i32, %c0_i32_0 : i32, i32
  }
  func.func @transform_3(%arg0: i32) -> (i32, i32) {
    %c0_i32 = arith.constant 0 : i32
    %c0_i32_0 = arith.constant 0 : i32
    %c0_i32_1 = arith.constant 0 : i32
    return %c0_i32, %c0_i32_0 : i32, i32
  }
  func.func @transform_4(%arg0: i32) -> (i32, i32) {
    %c0_i32 = arith.constant 0 : i32
    %c0_i32_0 = arith.constant 0 : i32
    %c0_i32_1 = arith.constant 0 : i32
    return %c0_i32, %c0_i32_0 : i32, i32
  }
  func.func @transform_5(%arg0: i32) -> (i32, i32) {
    %c0_i32 = arith.constant 0 : i32
    %c0_i32_0 = arith.constant 0 : i32
    %c0_i32_1 = arith.constant 0 : i32
    return %c0_i32, %c0_i32_0 : i32, i32
  }
  func.func @transform_6(%arg0: i32) -> (i32, i32) {
    %c0_i32 = arith.constant 0 : i32
    %c0_i32_0 = arith.constant 0 : i32
    %c0_i32_1 = arith.constant 0 : i32
    return %c0_i32, %c0_i32_0 : i32, i32
  }
  func.func @transform_7(%arg0: i32) -> (i32, i32) {
    %c0_i32 = arith.constant 0 : i32
    %c0_i32_0 = arith.constant 0 : i32
    return %arg0, %c0_i32 : i32, i32
  }
}

</mosaic_0001>

<llo_original>
// kernel: tpu_custom_call.1
$region0: #{tpu_custom_call.1}
  #allocation0 [shape = 'u32[]', space=smem, size = 0x4, offset = 0x4, fixed_abs, tag = 'smem constant byte address 0x4 - core index']
  #allocation1 [shape = 'u32[72,128]{1,0:T(1,128)}', space=vmem, size = 0x9000, scoped, tag = 'internal scratch']
  %s0 = inlined_call_operand.vmem [shape: f32[8,32], index: 0, kind: input, shape index: {}]
  %s1 = inlined_call_operand.vmem [shape: f32[32,64], index: 1, kind: input, shape index: {}]
  %s2 = inlined_call_operand.vmem [shape: f32[1,64], index: 2, kind: input, shape index: {}]
  %s3 = inlined_call_operand.vmem [shape: f32[64,32], index: 3, kind: input, shape index: {}]
  %s4 = inlined_call_operand.vmem [shape: f32[1,32], index: 4, kind: input, shape index: {}]
  %s5 = inlined_call_operand.vmem [shape: f32[32,16], index: 5, kind: input, shape index: {}]
  %s6 = inlined_call_operand.vmem [shape: f32[1,16], index: 6, kind: input, shape index: {}]
  %s7 = inlined_call_operand.hbm [shape: f32[8,16], index: 7, kind: output, shape index: {}]
  %s8 = sld [smem:[#allocation0]]
  $region38: #{tpu_custom_call.1} parent=0
    _
  %s10 = ssub.s32 1, %s8
  %s11 = scalar_select 0, %s10, %s8
  $region1: #{tpu_custom_call.1} parent=0
    #allocation2 [shape = 'u8[4096]{0}', space=vmem, size = 0x1000, scoped, tag = 'output window, operand 0, single buffered']
    #allocation3 [shape = 's32[1]{0}', space=sflag, size = 0x4, scoped, tag = 'scoped memory for tpu_custom_call.1']
    %12 = vsyncpa [#allocation3], 0
    // Predicated region
    $region2: #{tpu_custom_call.1} parent=1 // pred_check
      _
    $region3: #{tpu_custom_call.1} parent=1 // pred_check_branch
      %14 = sbr.rel (0) target = $region5
    $region4: #{tpu_custom_call.1} parent=1 // pred_region
      _
    $region5: #{tpu_custom_call.1} parent=1 // pred_fallthru
      _
    // Predicated region
    $region6: #{tpu_custom_call.1} parent=1 // pred_check
      _
    $region7: #{tpu_custom_call.1} parent=1 // pred_check_branch
      %16 = sbr.rel (0) target = $region9
    $region8: #{tpu_custom_call.1} parent=1 // pred_region
      _
    $region9: #{tpu_custom_call.1} parent=1 // pred_fallthru
      _
    // Predicated region
    $region10: #{tpu_custom_call.1} parent=1 // pred_check
      _
    $region11: #{tpu_custom_call.1} parent=1 // pred_check_branch
      %18 = sbr.rel (0) target = $region13
    $region12: #{tpu_custom_call.1} parent=1 // pred_region
      _
    $region13: #{tpu_custom_call.1} parent=1 // pred_fallthru
      _
    // Predicated region
    $region14: #{tpu_custom_call.1} parent=1 // pred_check
      _
    $region15: #{tpu_custom_call.1} parent=1 // pred_check_branch
      %20 = sbr.rel (0) target = $region17
    $region16: #{tpu_custom_call.1} parent=1 // pred_region
      _
    $region17: #{tpu_custom_call.1} parent=1 // pred_fallthru
      _
    // Predicated region
    $region18: #{tpu_custom_call.1} parent=1 // pred_check
      _
    $region19: #{tpu_custom_call.1} parent=1 // pred_check_branch
      %22 = sbr.rel (0) target = $region21
    $region20: #{tpu_custom_call.1} parent=1 // pred_region
      _
    $region21: #{tpu_custom_call.1} parent=1 // pred_fallthru
      _
    // Predicated region
    $region22: #{tpu_custom_call.1} parent=1 // pred_check
      _
    $region23: #{tpu_custom_call.1} parent=1 // pred_check_branch
      %24 = sbr.rel (0) target = $region25
    $region24: #{tpu_custom_call.1} parent=1 // pred_region
      _
    $region25: #{tpu_custom_call.1} parent=1 // pred_fallthru
      _
    // Predicated region
    $region26: #{tpu_custom_call.1} parent=1 // pred_check
      _
    $region27: #{tpu_custom_call.1} parent=1 // pred_check_branch
      %26 = sbr.rel (0) target = $region29
    $region28: #{tpu_custom_call.1} parent=1 // pred_region
      _
    $region29: #{tpu_custom_call.1} parent=1 // pred_fallthru
      _
    %v27 = vld [vmem:[%s0] sm:$0xff]
    %v28 = vld [vmem:[%s1] sm:$0xff]
    %v29 = vld [vmem:[%s1 + $0x8] sm:$0xff]
    %v30 = vld [vmem:[%s1 + $0x10] sm:$0xff]
    %v31 = vld [vmem:[%s1 + $0x18] sm:$0xff]
    %v32 = vld [vmem:[%s2] sm:$0x1]
    %v34 = vperm.slane %v32, 0
    %vm36 = vcmask 261120
    %v38 = vsel %vm36, %v27, 0
    %40 = vmatpush.msra.mxu0 0.0
    %41 = vmatpush.msra.mxu0 0.0
    %42 = vmatpush.msra.mxu0 0.0
    %43 = vmatpush.msra.mxu0 0.0
    %44 = vmatpush.msra.mxu0 0.0
    %45 = vmatpush.msra.mxu0 0.0
    %46 = vmatpush.msra.mxu0 0.0
    %47 = vmatpush.msra.mxu0 0.0
    %48 = vmatpush.msra.mxu0 0.0
    %49 = vmatpush.msra.mxu0 0.0
    %50 = vmatpush.msra.mxu0 0.0
    %51 = vmatpush.msra.mxu0 0.0
    %52 = vmatpush.msra.mxu0 %v31
    %53 = vmatpush.msra.mxu0 %v30
    %54 = vmatpush.msra.mxu0 %v29
    %55 = vmatpush.msra.mxu0 %v28
    %56 = vmatmul.f32.gmra.mxu0 %v38
    %v57 = vpop.f32.mrf.mxu0
    %v58 = vadd.f32 %v34, %v57
    %59 = vdwg.mxu0
    %v60 = vmul.f32 %v58, 0.01
    %v61 = vmax.f32 %v58, %v60
    %v62 = vld [vmem:[%s3] sm:$0xff]
    %v63 = vld [vmem:[%s3 + $0x8] sm:$0xff]
    %v64 = vld [vmem:[%s3 + $0x10] sm:$0xff]
    %v65 = vld [vmem:[%s3 + $0x18] sm:$0xff]
    %v66 = vld [vmem:[%s3 + $0x20] sm:$0xff]
    %v67 = vld [vmem:[%s3 + $0x28] sm:$0xff]
    %v68 = vld [vmem:[%s3 + $0x30] sm:$0xff]
    %v69 = vld [vmem:[%s3 + $0x38] sm:$0xff]
    %v70 = vld [vmem:[%s4] sm:$0x1]
    %v72 = vperm.slane %v70, 0
    %vm74 = vcmask 523264
    %v76 = vsel %vm74, %v61, 0
    %78 = vmatpush.msra.mxu0 0.0
    %79 = vmatpush.msra.mxu0 0.0
    %80 = vmatpush.msra.mxu0 0.0
    %81 = vmatpush.msra.mxu0 0.0
    %82 = vmatpush.msra.mxu0 0.0
    %83 = vmatpush.msra.mxu0 0.0
    %84 = vmatpush.msra.mxu0 0.0
    %85 = vmatpush.msra.mxu0 0.0
    %86 = vmatpush.msra.mxu0 %v69
    %87 = vmatpush.msra.mxu0 %v68
    %88 = vmatpush.msra.mxu0 %v67
    %89 = vmatpush.msra.mxu0 %v66
    %90 = vmatpush.msra.mxu0 %v65
    %91 = vmatpush.msra.mxu0 %v64
    %92 = vmatpush.msra.mxu0 %v63
    %93 = vmatpush.msra.mxu0 %v62
    %94 = vmatmul.f32.gmra.mxu0 %v76
    %v95 = vpop.f32.mrf.mxu0
    %v96 = vadd.f32 %v72, %v95
    %97 = vdwg.mxu0
    %v98 = vmul.f32 %v96, 0.01
    %v99 = vmax.f32 %v96, %v98
    %v100 = vld [vmem:[%s5] sm:$0xff]
    %v101 = vld [vmem:[%s5 + $0x8] sm:$0xff]
    %v102 = vld [vmem:[%s5 + $0x10] sm:$0xff]
    %v103 = vld [vmem:[%s5 + $0x18] sm:$0xff]
    %v104 = vld [vmem:[%s6] sm:$0x1]
    %v106 = vperm.slane %v104, 0
    %v109 = vsel %vm36, %v99, 0
    %111 = vmatpush.msra.mxu0 0.0
    %112 = vmatpush.msra.mxu0 0.0
    %113 = vmatpush.msra.mxu0 0.0
    %114 = vmatpush.msra.mxu0 0.0
    %115 = vmatpush.msra.mxu0 0.0
    %116 = vmatpush.msra.mxu0 0.0
    %117 = vmatpush.msra.mxu0 0.0
    %118 = vmatpush.msra.mxu0 0.0
    %119 = vmatpush.msra.mxu0 0.0
    %120 = vmatpush.msra.mxu0 0.0
    %121 = vmatpush.msra.mxu0 0.0
    %122 = vmatpush.msra.mxu0 0.0
    %123 = vmatpush.msra.mxu0 %v103
    %124 = vmatpush.msra.mxu0 %v102
    %125 = vmatpush.msra.mxu0 %v101
    %126 = vmatpush.msra.mxu0 %v100
    %127 = vmatmul.f32.gmra.mxu0 %v109
    %v128 = vpop.f32.mrf.mxu0
    %v129 = vadd.f32 %v106, %v128
    %130 = vdwg.mxu0
    %vm131 = vcmask 130048
    %v132 = vsel %vm131, %v129, -inf
    %133 = vmax.xlane.f32.xlu0 %v132
    %v134 = vpop.xlane.xlu0 %133
    %v135 = vsub.f32 %v129, %v134
    %v136 = vmul.f32 %v135, 1.442695
    %v137 = vpow.pop %v136
    %v138 = vsel %vm131, %v137, 0.0
    %139 = vadd.xlane.f32.xlu0 %v138
    %v140 = vpop.xlane.xlu0 %139
    %v141 = vrcp.pop %v140
    %v142 = vmul.f32 %v140, %v141
    %v143 = vsub.f32 1.0, %v142
    %v144 = vmul.f32 %v141, %v143
    %v145 = vadd.f32 %v141, %v144
    %vm146 = vweird.f32 %v140
    %vm147 = vweird.f32 %v141
    %vm148 = vmor %vm146, %vm147
    %v149 = vsel %vm148, %v141, %v145
    %v150 = vand.u32 2147483647, %v140
    %vm151 = vcmp.eq.f32.partialorder %v150, 8.507059e+37
    %v152 = vand.u32 %v140, 2147483648
    %v153 = vor.u32 1.1754944e-38, %v152
    %v154 = vsel %vm151, %v153, %v149
    %v155 = vmul.f32 %v137, %v154
    %156 = vst.msk [vmem:[#allocation2] sm:$0xff] %vm131, %v155
    // Predicated region
    $region30: #{tpu_custom_call.1} parent=1 // pred_check
      _
    $region31: #{tpu_custom_call.1} parent=1 // pred_check_branch
      %158 = sbr.rel (0) target = $region33
    $region32: #{tpu_custom_call.1} parent=1 // pred_region
      %160 = vsyncadd [#allocation3], 0
      %s162 = sshll.u32 [#allocation2], 4
      %s163 = int_to_ptr.vmem [resolvable:$true] %s162
      %s164 = sshll.u32 %s7, 4
      %s165 = int_to_ptr.hbm [resolvable:$true] %s164
      %167 = dma.vmem_to_hbm [thread:$0]  %s163, 128, %s165, [#allocation3]
    $region33: #{tpu_custom_call.1} parent=1 // pred_fallthru
      _
    // Predicated region
    $region34: #{tpu_custom_call.1} parent=1 // pred_check
      _
    $region35: #{tpu_custom_call.1} parent=1 // pred_check_branch
      %169 = sbr.rel (0) target = $region37
    $region36: #{tpu_custom_call.1} parent=1 // pred_region
      %171 = dma.done [#allocation3], 128
    $region37: #{tpu_custom_call.1} parent=1 // pred_fallthru
      _
    %172 = vsyncpa [#allocation3], 1

</llo_original>
